<compile_context>
chip_gen: v5e
topology: v5e:2x2
jax: 0.10.0
libtpu: 0.0.40
codegen_flags: <defaults>
</compile_context>

<pallas_src>
import jax
import jax.numpy as jnp
from jax.experimental import pallas as pl
from jax.experimental.pallas import tpu as pltpu


IN_F = 6
HID = 16
OUT1 = 13
OUT2 = 8
HEAD_W = OUT1 + OUT2          # 21 (fused classifier width)

# Packed-parameter slab layout (rows x cols = 56 x 24, f32); weights [out, in]:
#   rows  0:16  cols 0:6    -> W1^T  (16, 6)
#   rows  0:16  cols 8:9    -> b1    (16, 1)
#   rows 16:32  cols 0:16   -> W2^T  (16, 16)
#   rows 16:32  cols 16:17  -> b2    (16, 1)
#   rows 32:53  cols 0:16   -> Wc^T = [Wc1 | Wc2]^T  (21, 16)
#   rows 32:53  cols 16:17  -> bc   = [bc1 | bc2]^T  (21, 1)
SLAB_ROWS = 56
SLAB_COLS = 24

LANE = 128                     # TPU lane width
CAP_LANES = 16384              # max rows (lanes) per grid step
MIN_ROWS_FOR_SPLIT = 8192      # force >= 2 grid steps above this (v7x megacore)
VMEM_LIMIT_BYTES = 32 * 1024 * 1024


def _cdiv(a, b):
    return (a + b - 1) // b


def _round_up(v, m):
    return _cdiv(v, m) * m


def _choose_tiling(n):
    """Even-split lane tiling: padding waste < 128 rows, >=2 steps for large n."""
    n = max(int(n), 1)
    num_tiles = _cdiv(n, CAP_LANES)
    if n >= MIN_ROWS_FOR_SPLIT:
        num_tiles = max(num_tiles, 2)
    tm = max(LANE, _round_up(_cdiv(n, num_tiles), LANE))
    n_pad = _round_up(n, tm)
    return tm, n_pad


def _mlp_kernel(xt_ref, p_ref, out_ref):
    """Lane-dense MLP: x^T (6, TM) -> fused out^T (21, TM)."""
    xt = xt_ref[...]                                       # (6, TM)

    # Static slices of the resident parameter slab (no extra DMAs).
    w1t = p_ref[0:HID, 0:IN_F]                             # (16, 6)
    b1 = p_ref[0:HID, 8:9]                                 # (16, 1)
    w2t = p_ref[HID:2 * HID, 0:HID]                        # (16, 16)
    b2 = p_ref[HID:2 * HID, HID:HID + 1]                   # (16, 1)
    wct = p_ref[2 * HID:2 * HID + HEAD_W, 0:HID]           # (21, 16) fused heads
    bct = p_ref[2 * HID:2 * HID + HEAD_W, HID:HID + 1]     # (21, 1)

    # layer1: Linear(6, 16) + ReLU       h^T = W1^T @ x^T + b1
    h = jnp.dot(w1t, xt, preferred_element_type=jnp.float32) + b1
    h = jnp.maximum(h, 0.0)

    # layer2[0]: Linear(16, 16) + ReLU
    h = jnp.dot(w2t, h, preferred_element_type=jnp.float32) + b2
    h = jnp.maximum(h, 0.0)

    # fused classifier heads: one lane-dense (21, TM) matmul + unmasked store
    out_ref[...] = (jnp.dot(wct, h, preferred_element_type=jnp.float32)
                    + bct).astype(out_ref.dtype)


def pack_params(params):
    """Fold all weights/biases into one resident f32 slab. Call ONCE at init."""
    w1, b1, w2, b2, wc1, bc1, wc2, bc2 = params    # weights [in,out], biases (1,out)
    wct = jnp.concatenate([wc1, wc2], axis=1).T    # (21, 16)
    bct = jnp.concatenate([bc1, bc2], axis=1).T    # (21, 1)
    slab = jnp.zeros((SLAB_ROWS, SLAB_COLS), jnp.float32)
    slab = slab.at[0:HID, 0:IN_F].set(w1.T.astype(jnp.float32))
    slab = slab.at[0:HID, 8:9].set(b1.T.astype(jnp.float32))
    slab = slab.at[HID:2 * HID, 0:HID].set(w2.T.astype(jnp.float32))
    slab = slab.at[HID:2 * HID, HID:HID + 1].set(b2.T.astype(jnp.float32))
    slab = slab.at[2 * HID:2 * HID + HEAD_W, 0:HID].set(wct.astype(jnp.float32))
    slab = slab.at[2 * HID:2 * HID + HEAD_W, HID:HID + 1].set(bct.astype(jnp.float32))
    return slab


@jax.jit
def model_forward(x, edge_index, slab):
    """Forward pass of Model(layer_type=torch.nn.Linear, n_hidden=2)."""
    # edge_index accepted for signature parity; torch.nn.Linear ignores it.
    del edge_index
    n = x.shape[0]
    tm, n_pad = _choose_tiling(n)

    # Lane-dense layout: rows of x become lanes.
    xt = x.astype(jnp.float32).T                          # (6, n)
    if n_pad != n:
        xt = jnp.pad(xt, ((0, 0), (0, n_pad - n)))

    out_t = pl.pallas_call(
        _mlp_kernel,
        out_shape=jax.ShapeDtypeStruct((HEAD_W, n_pad), jnp.float32),
        grid=(n_pad // tm,),
        in_specs=[
            pl.BlockSpec((IN_F, tm), lambda i: (0, i)),               # x^T streamed
            pl.BlockSpec((SLAB_ROWS, SLAB_COLS), lambda i: (0, 0)),   # weights resident
        ],
        out_specs=pl.BlockSpec((HEAD_W, tm), lambda i: (0, i)),
        compiler_params=pltpu.CompilerParams(
            dimension_semantics=("parallel",),
            vmem_limit_bytes=VMEM_LIMIT_BYTES),
    )(xt, slab)

    fused = out_t[:, :n].T                                # (n, 21), drop padded rows
    return fused[:, :OUT1], fused[:, OUT1:HEAD_W]


def init_params(key):
    # Deterministic synthetic parameters (shapes from Model.__init__ with
    # layer_type=Linear, n_hidden=2). Weights stored as [in, out].
    ks = jax.random.split(key, 8)

    def lin(kw, kb, fan_in, fan_out):
        bound = 1.0 / jnp.sqrt(fan_in)
        w = jax.random.uniform(kw, (fan_in, fan_out), jnp.float32, -bound, bound)
        b = jax.random.uniform(kb, (1, fan_out), jnp.float32, -bound, bound)
        return w, b

    w1, b1 = lin(ks[0], ks[1], 6, 16)      # layer1
    w2, b2 = lin(ks[2], ks[3], 16, 16)     # layer2[0]
    wc1, bc1 = lin(ks[4], ks[5], 16, 13)   # classifier1
    wc2, bc2 = lin(ks[6], ks[7], 16, 8)    # classifier2
    return (w1, b1, w2, b2, wc1, bc1, wc2, bc2)


def reference_forward(x, params):
    w1, b1, w2, b2, wc1, bc1, wc2, bc2 = params
    h = jnp.maximum(x @ w1 + b1, 0.0)
    h = jnp.maximum(h @ w2 + b2, 0.0)
    return h @ wc1 + bc1, h @ wc2 + bc2


if __name__ == "__main__":
    key = jax.random.PRNGKey(0)
    k_x, k_p, k_e = jax.random.split(key, 3)

    N = 8  # number of nodes / samples
    x = jax.random.normal(k_x, (N, 6), dtype=jnp.float32)
    # edge_index-like input (unused by Linear layers), kept for parity.
    edge_index = jax.random.randint(k_e, (2, 16), 0, N, dtype=jnp.int32)

    params = init_params(k_p)
    slab = pack_params(params)   # packed once at init, reused every forward

    out1, out2 = model_forward(x, edge_index, slab)
    out1, out2 = jax.block_until_ready((out1, out2))

    ref1, ref2 = reference_forward(x, params)
    assert out1.shape == (N, 13) and out2.shape == (N, 8)
    assert jnp.allclose(out1, ref1, atol=1e-5, rtol=1e-5)
    assert jnp.allclose(out2, ref2, atol=1e-5, rtol=1e-5)

    print("KERNEL_OK")
</pallas_src>

<mosaic_0001>
module attributes {stable_mosaic.version = 11 : i64} {
  func.func @_mlp_kernel(%arg0: i32, %arg1: memref<6x128xf32, #tpu.memory_space<vmem>>, %arg2: memref<56x24xf32, #tpu.memory_space<vmem>>, %arg3: memref<21x128xf32, #tpu.memory_space<vmem>>) attributes {dimension_semantics = [#tpu.dimension_semantics<parallel>], iteration_bounds = array<i64: 1>, scalar_prefetch = 0 : i64, scratch_operands = 0 : i64, tpu.core_type = #tpu.core_type<tc>, window_params = [{transform_indices = @transform_0, window_bounds = array<i64: 6, 128>}, {pipeline_mode = #tpu.pipeline_mode<synchronous>, transform_indices = @transform_1, window_bounds = array<i64: 56, 24>}, {transform_indices = @transform_2, window_bounds = array<i64: 21, 128>}]} {
    %c0 = arith.constant 0 : index
    %c0_0 = arith.constant 0 : index
    %0 = vector.load %arg1[%c0, %c0_0] : memref<6x128xf32, #tpu.memory_space<vmem>>, vector<6x128xf32>
    %c0_1 = arith.constant 0 : index
    %c0_2 = arith.constant 0 : index
    %1 = vector.load %arg2[%c0_1, %c0_2] : memref<56x24xf32, #tpu.memory_space<vmem>>, vector<16x6xf32>
    %c0_3 = arith.constant 0 : index
    %c8 = arith.constant 8 : index
    %2 = vector.load %arg2[%c0_3, %c8] : memref<56x24xf32, #tpu.memory_space<vmem>>, vector<16x1xf32>
    %c16 = arith.constant 16 : index
    %c0_4 = arith.constant 0 : index
    %3 = vector.load %arg2[%c16, %c0_4] : memref<56x24xf32, #tpu.memory_space<vmem>>, vector<16x16xf32>
    %c16_5 = arith.constant 16 : index
    %c16_6 = arith.constant 16 : index
    %4 = vector.load %arg2[%c16_5, %c16_6] : memref<56x24xf32, #tpu.memory_space<vmem>>, vector<16x1xf32>
    %c32 = arith.constant 32 : index
    %c0_7 = arith.constant 0 : index
    %5 = vector.load %arg2[%c32, %c0_7] : memref<56x24xf32, #tpu.memory_space<vmem>>, vector<21x16xf32>
    %c32_8 = arith.constant 32 : index
    %c16_9 = arith.constant 16 : index
    %6 = vector.load %arg2[%c32_8, %c16_9] : memref<56x24xf32, #tpu.memory_space<vmem>>, vector<21x1xf32>
    %cst = arith.constant dense<0.000000e+00> : vector<16x128xf32>
    %7 = tpu.matmul %1, %0, %cst {dimension_numbers = #tpu.dot_dimension_numbers<[1], [0], [0], [1], [0, 0, 1, 1], [], []>} : vector<16x6xf32>, vector<6x128xf32>, vector<16x128xf32> -> vector<16x128xf32>
    %8 = vector.broadcast %2 : vector<16x1xf32> to vector<16x128xf32>
    %9 = arith.addf %7, %8 : vector<16x128xf32>
    %cst_10 = arith.constant 0.000000e+00 : f32
    %10 = vector.broadcast %cst_10 : f32 to vector<16x128xf32>
    %11 = arith.maximumf %9, %10 : vector<16x128xf32>
    %cst_11 = arith.constant dense<0.000000e+00> : vector<16x128xf32>
    %12 = tpu.matmul %3, %11, %cst_11 {dimension_numbers = #tpu.dot_dimension_numbers<[1], [0], [0], [1], [0, 0, 1, 1], [], []>} : vector<16x16xf32>, vector<16x128xf32>, vector<16x128xf32> -> vector<16x128xf32>
    %13 = vector.broadcast %4 : vector<16x1xf32> to vector<16x128xf32>
    %14 = arith.addf %12, %13 : vector<16x128xf32>
    %cst_12 = arith.constant 0.000000e+00 : f32
    %15 = vector.broadcast %cst_12 : f32 to vector<16x128xf32>
    %16 = arith.maximumf %14, %15 : vector<16x128xf32>
    %cst_13 = arith.constant dense<0.000000e+00> : vector<21x128xf32>
    %17 = tpu.matmul %5, %16, %cst_13 {dimension_numbers = #tpu.dot_dimension_numbers<[1], [0], [0], [1], [0, 0, 1, 1], [], []>} : vector<21x16xf32>, vector<16x128xf32>, vector<21x128xf32> -> vector<21x128xf32>
    %18 = vector.broadcast %6 : vector<21x1xf32> to vector<21x128xf32>
    %19 = arith.addf %17, %18 : vector<21x128xf32>
    %c0_14 = arith.constant 0 : index
    %c0_15 = arith.constant 0 : index
    %20 = vector.load %arg3[%c0_14, %c0_15] : memref<21x128xf32, #tpu.memory_space<vmem>>, vector<21x128xf32>
    tpu.vector_store %arg3[%c0_14, %c0_15], %19 {strides = array<i32>} : memref<21x128xf32, #tpu.memory_space<vmem>>, vector<21x128xf32>,
    return
  }
  func.func @transform_0(%arg0: i32) -> (i32, i32) {
    %c0_i32 = arith.constant 0 : i32
    %c0_i32_0 = arith.constant 0 : i32
    return %c0_i32, %arg0 : i32, i32
  }
  func.func @transform_1(%arg0: i32) -> (i32, i32) {
    %c0_i32 = arith.constant 0 : i32
    %c0_i32_0 = arith.constant 0 : i32
    %c0_i32_1 = arith.constant 0 : i32
    return %c0_i32, %c0_i32_0 : i32, i32
  }
  func.func @transform_2(%arg0: i32) -> (i32, i32) {
    %c0_i32 = arith.constant 0 : i32
    %c0_i32_0 = arith.constant 0 : i32
    return %c0_i32, %arg0 : i32, i32
  }
}

</mosaic_0001>

<llo_original>
// kernel: model_forward.1
$region0: #{model_forward.1}
  #allocation0 [shape = 'u32[]', space=smem, size = 0x4, offset = 0x4, fixed_abs, tag = 'smem constant byte address 0x4 - core index']
  #allocation1 [shape = 'u32[72,128]{1,0:T(1,128)}', space=vmem, size = 0x9000, scoped, tag = 'internal scratch']
  %s0 = inlined_call_operand.vmem [shape: f32[6,128], index: 0, kind: input, shape index: {}]
  %s1 = inlined_call_operand.vmem [shape: f32[56,24], index: 1, kind: input, shape index: {}]
  %s2 = inlined_call_operand.vmem [shape: f32[21,128], index: 2, kind: output, shape index: {}]
  %s3 = sld [smem:[#allocation0]]
  $region18: #{model_forward.1} parent=0
    _
  %s5 = ssub.s32 1, %s3
  %s6 = scalar_select 0, %s5, %s3
  // Predicated region
  $region2: #{model_forward.1} parent=0 // pred_check
    _
  $region3: #{model_forward.1} parent=0 // pred_check_branch
    %8 = sbr.rel (0) target = $region5
  $region4: #{model_forward.1} parent=0 // pred_region
    _
  $region5: #{model_forward.1} parent=0 // pred_fallthru
    _
  // Predicated region
  $region6: #{model_forward.1} parent=0 // pred_check
    _
  $region7: #{model_forward.1} parent=0 // pred_check_branch
    %10 = sbr.rel (0) target = $region9
  $region8: #{model_forward.1} parent=0 // pred_region
    _
  $region9: #{model_forward.1} parent=0 // pred_fallthru
    _
  %v11 = vld [vmem:[%s0] sm:$0x3f]
  %v12 = vld [vmem:[%s1] sm:$0xff]
  %v13 = vld [vmem:[%s1 + $0x8] sm:$0xff]
  %v14 = vld [vmem:[%s1 + $0x10] sm:$0xff]
  %v15 = vld [vmem:[%s1 + $0x18] sm:$0xff]
  %v16 = vld [vmem:[%s1 + $0x20] sm:$0xff]
  %v17 = vld [vmem:[%s1 + $0x28] sm:$0xff]
  %v18 = vld [vmem:[%s1 + $0x30] sm:$0x1f]
  %20 = vset.pattern.permute.xlu0 8
  %21 = vperm.xlu0 %20, %v12
  %v22 = vpop.permute.xlu0 %21
  %25 = vset.pattern.permute.xlu0 8
  %26 = vperm.xlu0 %25, %v13
  %v27 = vpop.permute.xlu0 %26
  %vm29 = vcmask 48128
  %v30 = vsel %vm29, %v12, 0
  %v32 = vsel %vm29, %v13, 0
  %vm34 = vcmask 1045504
  %v36 = vsel %vm34, %v11, 0
  %38 = vmatpush.msra.mxu0 0.0
  %39 = vmatpush.msra.mxu0 0.0
  %40 = vmatpush.msra.mxu0 0.0
  %41 = vmatpush.msra.mxu0 0.0
  %42 = vmatpush.msra.mxu0 0.0
  %43 = vmatpush.msra.mxu0 0.0
  %44 = vmatpush.msra.mxu0 0.0
  %45 = vmatpush.msra.mxu0 0.0
  %46 = vmatpush.msra.mxu0 0.0
  %47 = vmatpush.msra.mxu0 0.0
  %48 = vmatpush.msra.mxu0 0.0
  %49 = vmatpush.msra.mxu0 0.0
  %50 = vmatpush.msra.mxu0 0.0
  %51 = vmatpush.msra.mxu0 0.0
  %52 = vmatpush.msra.mxu0 0.0
  %53 = vmatpush.msra.mxu0 %v36
  %54 = vmatmul.f32.gmra.mxu0 %v30
  %v55 = vpop.f32.mrf.mxu0
  %v56 = vadd.f32 %v22, %v55
  %57 = vmatmul.f32.gmra.mxu0 %v32
  %v58 = vpop.f32.mrf.mxu0
  %v59 = vadd.f32 %v27, %v58
  %60 = vdwg.mxu0
  %v61 = vmax.f32 %v56, 0.0
  %v62 = vmax.f32 %v59, 0.0
  %64 = vset.pattern.permute.xlu0 16
  %65 = vperm.xlu0 %64, %v14
  %v66 = vpop.permute.xlu0 %65
  %69 = vset.pattern.permute.xlu0 16
  %70 = vperm.xlu0 %69, %v15
  %v71 = vpop.permute.xlu0 %70
  %vm73 = vcmask 130048
  %v74 = vsel %vm73, %v14, 0
  %v76 = vsel %vm73, %v15, 0
  %78 = vmatpush.msra.mxu0 0.0
  %79 = vmatpush.msra.mxu0 0.0
  %80 = vmatpush.msra.mxu0 0.0
  %81 = vmatpush.msra.mxu0 0.0
  %82 = vmatpush.msra.mxu0 0.0
  %83 = vmatpush.msra.mxu0 0.0
  %84 = vmatpush.msra.mxu0 0.0
  %85 = vmatpush.msra.mxu0 0.0
  %86 = vmatpush.msra.mxu0 0.0
  %87 = vmatpush.msra.mxu0 0.0
  %88 = vmatpush.msra.mxu0 0.0
  %89 = vmatpush.msra.mxu0 0.0
  %90 = vmatpush.msra.mxu0 0.0
  %91 = vmatpush.msra.mxu0 0.0
  %92 = vmatpush.msra.mxu0 %v62
  %93 = vmatpush.msra.mxu0 %v61
  %94 = vmatmul.f32.gmra.mxu0 %v74
  %v95 = vpop.f32.mrf.mxu0
  %v96 = vadd.f32 %v66, %v95
  %97 = vmatmul.f32.gmra.mxu0 %v76
  %v98 = vpop.f32.mrf.mxu0
  %v99 = vadd.f32 %v71, %v98
  %100 = vdwg.mxu0
  %v101 = vmax.f32 %v96, 0.0
  %v102 = vmax.f32 %v99, 0.0
  %104 = vset.pattern.permute.xlu0 16
  %105 = vperm.xlu0 %104, %v16
  %v106 = vpop.permute.xlu0 %105
  %109 = vset.pattern.permute.xlu0 16
  %110 = vperm.xlu0 %109, %v17
  %v111 = vpop.permute.xlu0 %110
  %114 = vset.pattern.permute.xlu0 16
  %115 = vperm.xlu0 %114, %v18
  %v116 = vpop.permute.xlu0 %115
  %v118 = vsel %vm73, %v16, 0
  %v120 = vsel %vm73, %v17, 0
  %v122 = vsel %vm73, %v18, 0
  %124 = vmatpush.msra.mxu0 0.0
  %125 = vmatpush.msra.mxu0 0.0
  %126 = vmatpush.msra.mxu0 0.0
  %127 = vmatpush.msra.mxu0 0.0
  %128 = vmatpush.msra.mxu0 0.0
  %129 = vmatpush.msra.mxu0 0.0
  %130 = vmatpush.msra.mxu0 0.0
  %131 = vmatpush.msra.mxu0 0.0
  %132 = vmatpush.msra.mxu0 0.0
  %133 = vmatpush.msra.mxu0 0.0
  %134 = vmatpush.msra.mxu0 0.0
  %135 = vmatpush.msra.mxu0 0.0
  %136 = vmatpush.msra.mxu0 0.0
  %137 = vmatpush.msra.mxu0 0.0
  %138 = vmatpush.msra.mxu0 %v102
  %139 = vmatpush.msra.mxu0 %v101
  %140 = vmatmul.f32.gmra.mxu0 %v118
  %v141 = vpop.f32.mrf.mxu0
  %v142 = vadd.f32 %v106, %v141
  %143 = vmatmul.f32.gmra.mxu0 %v120
  %v144 = vpop.f32.mrf.mxu0
  %v145 = vadd.f32 %v111, %v144
  %146 = vmatmul.f32.gmra.mxu0 %v122
  %v147 = vpop.f32.mrf.mxu0
  %v148 = vadd.f32 %v116, %v147
  %149 = vdwg.mxu0
  %150 = vst [vmem:[%s2] sm:$0xff] %v142
  %151 = vst [vmem:[%s2 + $0x8] sm:$0xff] %v145
  %152 = vst [vmem:[%s2 + $0x10] sm:$0x1f] %v148
  // Predicated region
  $region10: #{model_forward.1} parent=0 // pred_check
    _
  $region11: #{model_forward.1} parent=0 // pred_check_branch
    %154 = sbr.rel (0) target = $region13
  $region12: #{model_forward.1} parent=0 // pred_region
    _
  $region13: #{model_forward.1} parent=0 // pred_fallthru
    _
  // Predicated region
  $region14: #{model_forward.1} parent=0 // pred_check
    _
  $region15: #{model_forward.1} parent=0 // pred_check_branch
    %156 = sbr.rel (0) target = $region17
  $region16: #{model_forward.1} parent=0 // pred_region
    _
  $region17: #{model_forward.1} parent=0 // pred_fallthru
    _

</llo_original>
